<compile_context>
chip_gen: v6e
topology: v6e:2x2x1
jax: 0.10.0
libtpu: 0.0.40
codegen_flags: <defaults>
</compile_context>

<pallas_src>
import jax
import jax.numpy as jnp
from jax.experimental import pallas as pl
from jax.experimental.pallas import tpu as pltpu


def _sobel_kernel(x_ref, o_ref):
    # x_ref / o_ref: (Pt, H, W) planes for this grid step.
    x = x_ref[...].astype(jnp.float32)
    pt, H, W = x.shape

    # Boundary masks (row = sublane index within a plane, col = lane index).
    row = jax.lax.broadcasted_iota(jnp.int32, (pt, H, W), 1)
    col = jax.lax.broadcasted_iota(jnp.int32, (pt, H, W), 2)
    first_row = row == 0
    last_row = row == H - 1
    first_col = col == 0
    last_col = col == W - 1

    # +-1 row neighbours: sublane rotations (positive shifts only), with the
    # wrapped boundary row zeroed to emulate the zero padding of conv2d.
    up = jnp.where(first_row, 0.0, pltpu.roll(x, 1, axis=1))        # x(i-1, j)
    down = jnp.where(last_row, 0.0, pltpu.roll(x, H - 1, axis=1))   # x(i+1, j)

    # Separable Sobel: vertical smooth / diff once per column, then one
    # horizontal pass each for gx and gy.
    v = up + 2.0 * x + down          # [1, 2, 1]^T
    d = down - up                    # [-1, 0, 1]^T

    # +-1 column neighbours: lane rotations, wrapped boundary column zeroed.
    v_l = jnp.where(first_col, 0.0, pltpu.roll(v, 1, axis=2))       # v(i, j-1)
    v_r = jnp.where(last_col, 0.0, pltpu.roll(v, W - 1, axis=2))    # v(i, j+1)
    d_l = jnp.where(first_col, 0.0, pltpu.roll(d, 1, axis=2))
    d_r = jnp.where(last_col, 0.0, pltpu.roll(d, W - 1, axis=2))

    gx = v_r - v_l                   # [-1, 0, 1] horizontally on v
    gy = d_l + 2.0 * d + d_r         # [ 1, 2, 1] horizontally on d

    mag = jnp.sqrt(gx * gx + gy * gy)
    # Hardtanh(-3, 3): the magnitude is non-negative, only the upper clamp is live.
    o_ref[...] = jnp.minimum(mag, 3.0).astype(o_ref.dtype)


def sobel_conv2d(x, *, max_block_bytes=2 * 1024 * 1024):
    """x: (B, C, H, W) -> (B, C, H, W) Sobel magnitude clamped at 3 (x.dtype)."""
    B, C, H, W = x.shape
    P = B * C
    xf = x.reshape(P, H, W)  # metadata-only reshape for contiguous NCHW

    plane_bytes = H * W * x.dtype.itemsize
    if plane_bytes > max_block_bytes:
        # TODO(synk): row-tiled path with a 1-row halo (second grid axis with
        # shifted/element-offset in_specs) for planes larger than the budget.
        raise NotImplementedError(
            f"single plane ({plane_bytes} B) exceeds the per-block budget "
            f"({max_block_bytes} B); row-tiled halo path not implemented yet")

    # Planes per grid step from the byte budget alone (no divisor requirement).
    pt = max(1, min(P, max_block_bytes // plane_bytes))
    # Keep >= 2 grid steps whenever possible: v7x has 2 TensorCores, and the
    # "parallel" plane axis can only be sharded / double-buffered with >1 step.
    if P >= 2:
        pt = min(pt, pl.cdiv(P, 2))

    # Prefer a divisor of P near the budget (avoids a wrapper pad pass);
    # otherwise pad the plane axis up to a multiple of pt and slice afterwards.
    div = 1
    for cand in range(pt, 0, -1):
        if P % cand == 0:
            div = cand
            break
    if 2 * div >= pt:
        pt = div
        p_pad = P
    else:
        p_pad = pl.cdiv(P, pt) * pt
        xf = jnp.pad(xf, ((0, p_pad - P), (0, 0), (0, 0)))

    grid = (p_pad // pt,)

    out = pl.pallas_call(
        _sobel_kernel,
        out_shape=jax.ShapeDtypeStruct((p_pad, H, W), x.dtype),
        grid_spec=pltpu.PrefetchScalarGridSpec(
            num_scalar_prefetch=0,
            grid=grid,
            in_specs=[pl.BlockSpec((pt, H, W), lambda i: (i, 0, 0))],
            out_specs=pl.BlockSpec((pt, H, W), lambda i: (i, 0, 0)),
        ),
        compiler_params=pltpu.CompilerParams(
            dimension_semantics=("parallel",),
            vmem_limit_bytes=32 * 1024 * 1024,
        ),
    )(xf)

    if p_pad != P:
        out = out[:P]
    # TODO(synk): for small / non-multiple-of-128 W, a flattened (Pt, H*W) layout
    # with +-1 / +-W rolls would make the output store lane-dense.
    return out.reshape(B, C, H, W)


def _reference(x):
    """Pure-JAX reference (depthwise 3x3 Sobel via explicit stencil)."""
    B, C, H, W = x.shape
    xp = jnp.pad(x, ((0, 0), (0, 0), (1, 1), (1, 1)))

    def s(di, dj):
        return xp[:, :, di:di + H, dj:dj + W]

    gx = (-s(0, 0) + s(0, 2) - 2 * s(1, 0) + 2 * s(1, 2) - s(2, 0) + s(2, 2))
    gy = (-s(0, 0) - 2 * s(0, 1) - s(0, 2) + s(2, 0) + 2 * s(2, 1) + s(2, 2))
    return jnp.clip(jnp.sqrt(gx * gx + gy * gy), -3.0, 3.0)


if __name__ == "__main__":
    key = jax.random.PRNGKey(0)
    B, C, H, W = 2, 4, 16, 16
    x = jax.random.normal(key, (B, C, H, W), dtype=jnp.float32)

    out = sobel_conv2d(x)
    out = jax.block_until_ready(out)

    ref = _reference(x)
    assert out.shape == (B, C, H, W)
    assert jnp.allclose(out, ref, atol=1e-5, rtol=1e-5)

    print("KERNEL_OK")
</pallas_src>

<mosaic_0001>
module attributes {stable_mosaic.version = 11 : i64} {
  func.func @_sobel_kernel(%arg0: i32, %arg1: memref<4x16x16xf32, #tpu.memory_space<vmem>>, %arg2: memref<4x16x16xf32, #tpu.memory_space<vmem>>) attributes {dimension_semantics = [#tpu.dimension_semantics<parallel>], iteration_bounds = array<i64: 2>, scalar_prefetch = 0 : i64, scratch_operands = 0 : i64, tpu.core_type = #tpu.core_type<tc>, window_params = [{transform_indices = @transform_0, window_bounds = array<i64: 4, 16, 16>}, {transform_indices = @transform_1, window_bounds = array<i64: 4, 16, 16>}]} {
    %c0 = arith.constant 0 : index
    %c0_0 = arith.constant 0 : index
    %c0_1 = arith.constant 0 : index
    %0 = vector.load %arg1[%c0, %c0_0, %c0_1] : memref<4x16x16xf32, #tpu.memory_space<vmem>>, vector<4x16x16xf32>
    %1 = tpu.iota {dimensions = array<i32: 1>} : vector<4x16x16xi32>
    %2 = tpu.iota {dimensions = array<i32: 2>} : vector<4x16x16xi32>
    %c0_i32 = arith.constant 0 : i32
    %3 = vector.broadcast %c0_i32 : i32 to vector<4x16x16xi32>
    %4 = arith.cmpi eq, %1, %3 : vector<4x16x16xi32>
    %c15_i32 = arith.constant 15 : i32
    %5 = vector.broadcast %c15_i32 : i32 to vector<4x16x16xi32>
    %6 = arith.cmpi eq, %1, %5 : vector<4x16x16xi32>
    %c0_i32_2 = arith.constant 0 : i32
    %7 = vector.broadcast %c0_i32_2 : i32 to vector<4x16x16xi32>
    %8 = arith.cmpi eq, %2, %7 : vector<4x16x16xi32>
    %c15_i32_3 = arith.constant 15 : i32
    %9 = vector.broadcast %c15_i32_3 : i32 to vector<4x16x16xi32>
    %10 = arith.cmpi eq, %2, %9 : vector<4x16x16xi32>
    %c1_i32 = arith.constant 1 : i32
    %11 = tpu.dynamic_rotate %0 by %c1_i32 dim 1 : vector<4x16x16xf32>, i32 -> vector<4x16x16xf32>
    %cst = arith.constant 0.000000e+00 : f32
    %12 = vector.broadcast %cst : f32 to vector<4x16x16xf32>
    %13 = arith.select %4, %12, %11 : vector<4x16x16xi1>, vector<4x16x16xf32>
    %c15_i32_4 = arith.constant 15 : i32
    %14 = tpu.dynamic_rotate %0 by %c15_i32_4 dim 1 : vector<4x16x16xf32>, i32 -> vector<4x16x16xf32>
    %cst_5 = arith.constant 0.000000e+00 : f32
    %15 = vector.broadcast %cst_5 : f32 to vector<4x16x16xf32>
    %16 = arith.select %6, %15, %14 : vector<4x16x16xi1>, vector<4x16x16xf32>
    %cst_6 = arith.constant 2.000000e+00 : f32
    %17 = vector.broadcast %cst_6 : f32 to vector<4x16x16xf32>
    %18 = arith.mulf %17, %0 : vector<4x16x16xf32>
    %19 = arith.addf %13, %18 : vector<4x16x16xf32>
    %20 = arith.addf %19, %16 : vector<4x16x16xf32>
    %21 = arith.subf %16, %13 : vector<4x16x16xf32>
    %c1_i32_7 = arith.constant 1 : i32
    %22 = tpu.dynamic_rotate %20 by %c1_i32_7 dim 2 : vector<4x16x16xf32>, i32 -> vector<4x16x16xf32>
    %cst_8 = arith.constant 0.000000e+00 : f32
    %23 = vector.broadcast %cst_8 : f32 to vector<4x16x16xf32>
    %24 = arith.select %8, %23, %22 : vector<4x16x16xi1>, vector<4x16x16xf32>
    %c15_i32_9 = arith.constant 15 : i32
    %25 = tpu.dynamic_rotate %20 by %c15_i32_9 dim 2 : vector<4x16x16xf32>, i32 -> vector<4x16x16xf32>
    %cst_10 = arith.constant 0.000000e+00 : f32
    %26 = vector.broadcast %cst_10 : f32 to vector<4x16x16xf32>
    %27 = arith.select %10, %26, %25 : vector<4x16x16xi1>, vector<4x16x16xf32>
    %c1_i32_11 = arith.constant 1 : i32
    %28 = tpu.dynamic_rotate %21 by %c1_i32_11 dim 2 : vector<4x16x16xf32>, i32 -> vector<4x16x16xf32>
    %cst_12 = arith.constant 0.000000e+00 : f32
    %29 = vector.broadcast %cst_12 : f32 to vector<4x16x16xf32>
    %30 = arith.select %8, %29, %28 : vector<4x16x16xi1>, vector<4x16x16xf32>
    %c15_i32_13 = arith.constant 15 : i32
    %31 = tpu.dynamic_rotate %21 by %c15_i32_13 dim 2 : vector<4x16x16xf32>, i32 -> vector<4x16x16xf32>
    %cst_14 = arith.constant 0.000000e+00 : f32
    %32 = vector.broadcast %cst_14 : f32 to vector<4x16x16xf32>
    %33 = arith.select %10, %32, %31 : vector<4x16x16xi1>, vector<4x16x16xf32>
    %34 = arith.subf %27, %24 : vector<4x16x16xf32>
    %cst_15 = arith.constant 2.000000e+00 : f32
    %35 = vector.broadcast %cst_15 : f32 to vector<4x16x16xf32>
    %36 = arith.mulf %35, %21 : vector<4x16x16xf32>
    %37 = arith.addf %30, %36 : vector<4x16x16xf32>
    %38 = arith.addf %37, %33 : vector<4x16x16xf32>
    %39 = arith.mulf %34, %34 : vector<4x16x16xf32>
    %40 = arith.mulf %38, %38 : vector<4x16x16xf32>
    %41 = arith.addf %39, %40 : vector<4x16x16xf32>
    %42 = math.sqrt %41 : vector<4x16x16xf32>
    %cst_16 = arith.constant 3.000000e+00 : f32
    %43 = vector.broadcast %cst_16 : f32 to vector<4x16x16xf32>
    %44 = arith.minimumf %42, %43 : vector<4x16x16xf32>
    %c0_17 = arith.constant 0 : index
    %c0_18 = arith.constant 0 : index
    %c0_19 = arith.constant 0 : index
    %45 = vector.load %arg2[%c0_17, %c0_18, %c0_19] : memref<4x16x16xf32, #tpu.memory_space<vmem>>, vector<4x16x16xf32>
    tpu.vector_store %arg2[%c0_17, %c0_18, %c0_19], %44 {strides = array<i32>} : memref<4x16x16xf32, #tpu.memory_space<vmem>>, vector<4x16x16xf32>,
    return
  }
  func.func @transform_0(%arg0: i32) -> (i32, i32, i32) {
    %c0_i32 = arith.constant 0 : i32
    %c0_i32_0 = arith.constant 0 : i32
    %c0_i32_1 = arith.constant 0 : i32
    return %arg0, %c0_i32, %c0_i32_0 : i32, i32, i32
  }
  func.func @transform_1(%arg0: i32) -> (i32, i32, i32) {
    %c0_i32 = arith.constant 0 : i32
    %c0_i32_0 = arith.constant 0 : i32
    %c0_i32_1 = arith.constant 0 : i32
    return %arg0, %c0_i32, %c0_i32_0 : i32, i32, i32
  }
}

</mosaic_0001>

<llo_original>
// kernel: tpu_custom_call.1
$region0: #{tpu_custom_call.1}
  #allocation0 [shape = 'u32[]', space=smem, size = 0x4, offset = 0x4, fixed_abs, tag = 'smem constant byte address 0x4 - core index']
  #allocation1 [shape = 'u32[144,128]{1,0:T(1,128)}', space=vmem, size = 0x12000, scoped, tag = 'internal scratch']
  %s0 = inlined_call_operand.hbm [shape: f32[8,16,16], index: 0, kind: input, shape index: {}]
  %s1 = inlined_call_operand.hbm [shape: f32[8,16,16], index: 1, kind: output, shape index: {}]
  %s2 = sld [smem:[#allocation0]]
  $region41: #{tpu_custom_call.1} parent=0
    _
  %s4 = ssub.s32 1, %s2
  %s5 = scalar_select 0, %s4, %s2
  $region1: #{tpu_custom_call.1} parent=0
    #allocation2 [shape = 'u8[65536]{0}', space=vmem, size = 0x10000, scoped, tag = 'input window, operand 0']
    #allocation3 [shape = 's32[2]{0}', space=sflag, size = 0x8, scoped, tag = 'scoped memory for tpu_custom_call.1']
    #allocation4 [shape = 's32[2]{0}', space=sflag, size = 0x8, scoped, tag = 'scoped memory for tpu_custom_call.1']
    #allocation5 [shape = 'u8[65536]{0}', space=vmem, size = 0x10000, scoped, tag = 'output window, operand 0']
    %6 = vsyncpa [#allocation3], 0
    %s7 = scalar_lea.sflag [#allocation3], 1
    %8 = vsyncpa %s7, 0
    %9 = vsyncpa [#allocation4], 0
    %s10 = scalar_lea.sflag [#allocation4], 1
    %11 = vsyncpa %s10, 0
    loop: start=0, step=1, limit=4
    $region2: #{tpu_custom_call.1} parent=1 // loop_pre_header
      _
    $region3: #{tpu_custom_call.1} parent=1 // loop_header
      %s13 = sphi 0, %s17
      %p14 = scmp.ge.s32.totalorder %s13, 4
      %s23 = sphi 0, %s25
      %s26 = sphi 0, %s23
      %s27 = sphi 0, %s26
      %s43 = sphi 0, %s27
      %s49 = sphi 0, %s51
      %s52 = sphi 0, %s49
      %s53 = sphi 0, %s52
      %s69 = sphi 0, %s53
    $region4: #{tpu_custom_call.1} parent=1 // loop_header_branch
      %16 = sbr.rel (%p14) target = $region8
    $region5: #{tpu_custom_call.1} parent=1 // loop_body
      %s18 = ssub.s32 %s13, 1
      %s19 = ssub.s32 %s13, 2
      %s20 = sadd.s32 %s13, 1
      %s21 = ssub.s32 %s13, %s20
      %p22 = scmp.eq.s32.totalorder %s21, 0
      %s24 = sadd.s32 %s23, 1
      %s25 = scalar_select %p22, %s23, %s24
      %p28 = pneg %p22
      %p29 = scmp.eq.s32.totalorder %s13, 1
      %p30 = por %p28, %p29
      %p31 = scmp.ne.s32.totalorder %s23, %s26
      %p32 = scmp.eq.s32.totalorder %s13, 0
      %p33 = por %p31, %p32
      %p34 = scmp.ne.s32.totalorder %s23, %s26
      %p35 = scmp.eq.s32.totalorder %s18, 1
      %p36 = por %p34, %p35
      %p37 = scmp.ne.s32.totalorder %s26, %s27
      %p38 = scmp.eq.s32.totalorder %s18, 0
      %p39 = por %p37, %p38
      %p40 = scmp.ne.s32.totalorder %s26, %s27
      %p41 = scmp.eq.s32.totalorder %s19, 1
      %p42 = por %p40, %p41
      %p44 = scmp.ne.s32.totalorder %s27, %s43
      %p45 = scmp.eq.s32.totalorder %s19, 0
      %p46 = por %p44, %p45
      %s47 = ssub.s32 %s13, %s20
      %p48 = scmp.eq.s32.totalorder %s47, 0
      %s50 = sadd.s32 %s49, 1
      %s51 = scalar_select %p48, %s49, %s50
      %p54 = pneg %p48
      %p55 = scmp.eq.s32.totalorder %s13, 1
      %p56 = por %p54, %p55
      %p57 = scmp.ne.s32.totalorder %s49, %s52
      %p58 = scmp.eq.s32.totalorder %s13, 0
      %p59 = por %p57, %p58
      %p60 = scmp.ne.s32.totalorder %s49, %s52
      %p61 = scmp.eq.s32.totalorder %s18, 1
      %p62 = por %p60, %p61
      %p63 = scmp.ne.s32.totalorder %s52, %s53
      %p64 = scmp.eq.s32.totalorder %s18, 0
      %p65 = por %p63, %p64
      %p66 = scmp.ne.s32.totalorder %s52, %s53
      %p67 = scmp.eq.s32.totalorder %s19, 1
      %p68 = por %p66, %p67
      %p70 = scmp.ne.s32.totalorder %s53, %s69
      %p71 = scmp.eq.s32.totalorder %s19, 0
      %p72 = por %p70, %p71
      %p73 = scmp.le.s32.totalorder 1, %s13
      %p74 = scmp.lt.s32.totalorder %s13, 3
      %p75 = pnand %p73, %p74
      %p76 = pneg %p75
      // Predicated region
      $region9: #{tpu_custom_call.1} parent=5 // pred_check
        _
      $region10: #{tpu_custom_call.1} parent=5 // pred_check_branch
        %78 = sbr.rel (%p75) target = $region12
      $region11: #{tpu_custom_call.1} parent=5 // pred_region
        %s79 = ssub.s32 %s13, 1
      $region12: #{tpu_custom_call.1} parent=5 // pred_fallthru
        _
      %p80 = scmp.lt.s32.totalorder %s13, 2
      // Predicated region
      $region13: #{tpu_custom_call.1} parent=5 // pred_check
        %p81 = pneg %p80
      $region14: #{tpu_custom_call.1} parent=5 // pred_check_branch
        %83 = sbr.rel (%p81) target = $region16
      $region15: #{tpu_custom_call.1} parent=5 // pred_region
        // Predicated region
        $region17: #{tpu_custom_call.1} parent=15 // pred_check
          %p84 = pneg %p33
        $region18: #{tpu_custom_call.1} parent=15 // pred_check_branch
          %86 = sbr.rel (%p84) target = $region20
        $region19: #{tpu_custom_call.1} parent=15 // pred_region
          %s87 = sand.u32 %s23, 1
          %s88 = scalar_lea.sflag [#allocation3], %s87
          %s89 = sand.u32 %s23, 1
          %s90 = smul.addr %s89, 64
          %s91 = scalar_lea.vmem [#allocation2], %s90
          %s92 = smul.u32 4, %s13
          %s94 = ssub.s32 1024, 1024
          %95 = vsyncadd %s88, %s94
          %s96 = smul.addr %s92, 2
          %s97 = smul.addr %s96, 128
          %s98 = scalar_lea.hbm %s0, %s97
          %s99 = sshll.u32 %s91, 4
          %s100 = int_to_ptr.vmem [resolvable:$true] %s99
          %105 = dma.hbm_to_vmem [thread:$0]  %s98, 1024, %s100, %s88, 128, 128, 8
        $region20: #{tpu_custom_call.1} parent=15 // pred_fallthru
          _
      $region16: #{tpu_custom_call.1} parent=5 // pred_fallthru
        _
      %p106 = scmp.le.s32.totalorder 1, %s13
      %p107 = scmp.lt.s32.totalorder %s13, 3
      %p108 = pnand %p106, %p107
      %p109 = pneg %p108
      // Predicated region
      $region21: #{tpu_custom_call.1} parent=5 // pred_check
        _
      $region22: #{tpu_custom_call.1} parent=5 // pred_check_branch
        %111 = sbr.rel (%p108) target = $region24
      $region23: #{tpu_custom_call.1} parent=5 // pred_region
        %s112 = ssub.s32 %s13, 1
        %s113 = sand.u32 %s26, 1
        %s114 = scalar_lea.sflag [#allocation3], %s113
        %s115 = sand.u32 %s26, 1
        %s116 = smul.addr %s115, 64
        %s117 = scalar_lea.vmem [#allocation2], %s116
        // Predicated region
        $region25: #{tpu_custom_call.1} parent=23 // pred_check
          %p118 = pneg %p39
        $region26: #{tpu_custom_call.1} parent=23 // pred_check_branch
          %120 = sbr.rel (%p118) target = $region28
        $region27: #{tpu_custom_call.1} parent=23 // pred_region
          %121 = dma.done %s114, 1024
        $region28: #{tpu_custom_call.1} parent=23 // pred_fallthru
          _
        %s122 = sand.u32 %s26, 1
        %s123 = scalar_lea.sflag [#allocation3], %s122
        %s124 = sand.u32 %s26, 1
        %s125 = smul.addr %s124, 64
        %s126 = scalar_lea.vmem [#allocation2], %s125
        %p127 = pneg %p39
        %p128 = pneg %p36
        %p129 = pneg %p65
        %p130 = pneg %p62
        %s131 = sand.u32 %s52, 1
        %s132 = scalar_lea.sflag [#allocation4], %s131
        %s133 = sand.u32 %s52, 1
        %s134 = smul.addr %s133, 64
        %s135 = scalar_lea.vmem [#allocation5], %s134
        %s136 = smul.u32 4, %s18
        %s137 = smul.u32 4, %s18
        %v138 = vld [vmem:[%s117] sm:$0xff]
        %v139 = vld [vmem:[%s117 + $0x8] sm:$0xff]
        %v140 = vld [vmem:[%s117 + $0x10] sm:$0xff]
        %v141 = vld [vmem:[%s117 + $0x18] sm:$0xff]
        %v142 = vld [vmem:[%s117 + $0x20] sm:$0xff]
        %v143 = vld [vmem:[%s117 + $0x28] sm:$0xff]
        %v144 = vld [vmem:[%s117 + $0x30] sm:$0xff]
        %v145 = vld [vmem:[%s117 + $0x38] sm:$0xff]
        %v146 = vlaneseq
        %v147 = vshrl.u32 %v146, 7
        %v148 = vadd.s32 %v147, 8
        %v149 = vlaneseq
        %v150 = vand.u32 %v149, 127
        %vm151 = vcmp.eq.s32.totalorder %v147, 0
        %vm152 = vcmp.eq.s32.totalorder %v148, 0
        %vm153 = vcmp.eq.s32.totalorder %v147, 15
        %vm154 = vcmp.eq.s32.totalorder %v148, 15
        %vm155 = vcmp.eq.s32.totalorder %v150, 0
        %vm156 = vcmp.eq.s32.totalorder %v150, 15
        %v157 = vrot.slane %v138, 7
        %v158 = vrot.slane %v140, 7
        %v159 = vrot.slane %v142, 7
        %v160 = vrot.slane %v144, 7
        %v161 = vrot.slane %v139, 7
        %v162 = vrot.slane %v141, 7
        %v163 = vrot.slane %v143, 7
        %v164 = vrot.slane %v145, 7
        %vm165 = vcmp.lt.s32.totalorder %v147, 1
        %v166 = vsel %vm165, %v157, %v161
        %v167 = vsel %vm165, %v158, %v162
        %v168 = vsel %vm165, %v159, %v163
        %v169 = vsel %vm165, %v160, %v164
        %v170 = vsel %vm165, %v161, %v157
        %v171 = vsel %vm165, %v162, %v158
        %v172 = vsel %vm165, %v163, %v159
        %v173 = vsel %vm165, %v164, %v160
        %v174 = vsel %vm151, 0.0, %v170
        %v175 = vsel %vm152, 0.0, %v166
        %v176 = vsel %vm151, 0.0, %v171
        %v177 = vsel %vm152, 0.0, %v167
        %v178 = vsel %vm151, 0.0, %v172
        %v179 = vsel %vm152, 0.0, %v168
        %v180 = vsel %vm151, 0.0, %v173
        %v181 = vsel %vm152, 0.0, %v169
        %v182 = vrot.slane %v138, 1
        %v183 = vrot.slane %v140, 1
        %v184 = vrot.slane %v142, 1
        %v185 = vrot.slane %v144, 1
        %v186 = vrot.slane %v139, 1
        %v187 = vrot.slane %v141, 1
        %v188 = vrot.slane %v143, 1
        %v189 = vrot.slane %v145, 1
        %vm190 = vcmp.lt.s32.totalorder %v147, 7
        %v191 = vsel %vm190, %v182, %v186
        %v192 = vsel %vm190, %v183, %v187
        %v193 = vsel %vm190, %v184, %v188
        %v194 = vsel %vm190, %v185, %v189
        %v195 = vsel %vm190, %v186, %v182
        %v196 = vsel %vm190, %v187, %v183
        %v197 = vsel %vm190, %v188, %v184
        %v198 = vsel %vm190, %v189, %v185
        %v199 = vsel %vm153, 0.0, %v191
        %v200 = vsel %vm154, 0.0, %v195
        %v201 = vsel %vm153, 0.0, %v192
        %v202 = vsel %vm154, 0.0, %v196
        %v203 = vsel %vm153, 0.0, %v193
        %v204 = vsel %vm154, 0.0, %v197
        %v205 = vsel %vm153, 0.0, %v194
        %v206 = vsel %vm154, 0.0, %v198
        %v207 = vmul.f32 %v138, 2.0
        %v208 = vmul.f32 %v139, 2.0
        %v209 = vmul.f32 %v140, 2.0
        %v210 = vmul.f32 %v141, 2.0
        %v211 = vmul.f32 %v142, 2.0
        %v212 = vmul.f32 %v143, 2.0
        %v213 = vmul.f32 %v144, 2.0
        %v214 = vmul.f32 %v145, 2.0
        %v215 = vadd.f32 %v174, %v207
        %v216 = vadd.f32 %v175, %v208
        %v217 = vadd.f32 %v176, %v209
        %v218 = vadd.f32 %v177, %v210
        %v219 = vadd.f32 %v178, %v211
        %v220 = vadd.f32 %v179, %v212
        %v221 = vadd.f32 %v180, %v213
        %v222 = vadd.f32 %v181, %v214
        %v223 = vadd.f32 %v215, %v199
        %v224 = vadd.f32 %v216, %v200
        %v225 = vadd.f32 %v217, %v201
        %v226 = vadd.f32 %v218, %v202
        %v227 = vadd.f32 %v219, %v203
        %v228 = vadd.f32 %v220, %v204
        %v229 = vadd.f32 %v221, %v205
        %v230 = vadd.f32 %v222, %v206
        %v231 = vsub.f32 %v199, %v174
        %v232 = vsub.f32 %v200, %v175
        %v233 = vsub.f32 %v201, %v176
        %v234 = vsub.f32 %v202, %v177
        %v235 = vsub.f32 %v203, %v178
        %v236 = vsub.f32 %v204, %v179
        %v237 = vsub.f32 %v205, %v180
        %v238 = vsub.f32 %v206, %v181
        %vm239 = vcmask 1047680
        %240 = vrot.lane.b32.xlu0 %v223, 16
        %v241 = vpop.permute.xlu0 %240
        %v242 = vsel %vm239, %v241, %v223
        %243 = vrot.lane.b32.xlu0 %v224, 16
        %v244 = vpop.permute.xlu0 %243
        %v245 = vsel %vm239, %v244, %v224
        %246 = vrot.lane.b32.xlu0 %v225, 16
        %v247 = vpop.permute.xlu0 %246
        %v248 = vsel %vm239, %v247, %v225
        %249 = vrot.lane.b32.xlu0 %v226, 16
        %v250 = vpop.permute.xlu0 %249
        %v251 = vsel %vm239, %v250, %v226
        %252 = vrot.lane.b32.xlu0 %v227, 16
        %v253 = vpop.permute.xlu0 %252
        %v254 = vsel %vm239, %v253, %v227
        %255 = vrot.lane.b32.xlu0 %v228, 16
        %v256 = vpop.permute.xlu0 %255
        %v257 = vsel %vm239, %v256, %v228
        %258 = vrot.lane.b32.xlu0 %v229, 16
        %v259 = vpop.permute.xlu0 %258
        %v260 = vsel %vm239, %v259, %v229
        %261 = vrot.lane.b32.xlu0 %v230, 16
        %v262 = vpop.permute.xlu0 %261
        %v263 = vsel %vm239, %v262, %v230
        %264 = vrot.lane.b32.xlu0 %v242, 16
        %v265 = vpop.permute.xlu0 %264
        %266 = vrot.lane.b32.xlu0 %v245, 16
        %v267 = vpop.permute.xlu0 %266
        %268 = vrot.lane.b32.xlu0 %v248, 16
        %v269 = vpop.permute.xlu0 %268
        %270 = vrot.lane.b32.xlu0 %v251, 16
        %v271 = vpop.permute.xlu0 %270
        %272 = vrot.lane.b32.xlu0 %v254, 16
        %v273 = vpop.permute.xlu0 %272
        %274 = vrot.lane.b32.xlu0 %v257, 16
        %v275 = vpop.permute.xlu0 %274
        %276 = vrot.lane.b32.xlu0 %v260, 16
        %v277 = vpop.permute.xlu0 %276
        %278 = vrot.lane.b32.xlu0 %v263, 16
        %v279 = vpop.permute.xlu0 %278
        %v280 = vsel %vm239, %v265, %v223
        %v281 = vsel %vm239, %v267, %v224
        %v282 = vsel %vm239, %v269, %v225
        %v283 = vsel %vm239, %v271, %v226
        %v284 = vsel %vm239, %v273, %v227
        %v285 = vsel %vm239, %v275, %v228
        %v286 = vsel %vm239, %v277, %v229
        %v287 = vsel %vm239, %v279, %v230
        %296 = vrot.lane.b32.xlu0 %v280, 113
        %v297 = vpop.permute.xlu0 %296
        %298 = vrot.lane.b32.xlu0 %v281, 113
        %v299 = vpop.permute.xlu0 %298
        %300 = vrot.lane.b32.xlu0 %v282, 113
        %v301 = vpop.permute.xlu0 %300
        %302 = vrot.lane.b32.xlu0 %v283, 113
        %v303 = vpop.permute.xlu0 %302
        %304 = vrot.lane.b32.xlu0 %v284, 113
        %v305 = vpop.permute.xlu0 %304
        %306 = vrot.lane.b32.xlu0 %v285, 113
        %v307 = vpop.permute.xlu0 %306
        %308 = vrot.lane.b32.xlu0 %v286, 113
        %v309 = vpop.permute.xlu0 %308
        %310 = vrot.lane.b32.xlu0 %v287, 113
        %v311 = vpop.permute.xlu0 %310
        %v320 = vsel %vm155, 0.0, %v297
        %v321 = vsel %vm155, 0.0, %v299
        %v322 = vsel %vm155, 0.0, %v301
        %v323 = vsel %vm155, 0.0, %v303
        %v324 = vsel %vm155, 0.0, %v305
        %v325 = vsel %vm155, 0.0, %v307
        %v326 = vsel %vm155, 0.0, %v309
        %v327 = vsel %vm155, 0.0, %v311
        %328 = vrot.lane.b32.xlu0 %v280, 127
        %v329 = vpop.permute.xlu0 %328
        %330 = vrot.lane.b32.xlu0 %v281, 127
        %v331 = vpop.permute.xlu0 %330
        %332 = vrot.lane.b32.xlu0 %v282, 127
        %v333 = vpop.permute.xlu0 %332
        %334 = vrot.lane.b32.xlu0 %v283, 127
        %v335 = vpop.permute.xlu0 %334
        %336 = vrot.lane.b32.xlu0 %v284, 127
        %v337 = vpop.permute.xlu0 %336
        %338 = vrot.lane.b32.xlu0 %v285, 127
        %v339 = vpop.permute.xlu0 %338
        %340 = vrot.lane.b32.xlu0 %v286, 127
        %v341 = vpop.permute.xlu0 %340
        %342 = vrot.lane.b32.xlu0 %v287, 127
        %v343 = vpop.permute.xlu0 %342
        %v352 = vsel %vm156, 0.0, %v329
        %v353 = vsel %vm156, 0.0, %v331
        %v354 = vsel %vm156, 0.0, %v333
        %v355 = vsel %vm156, 0.0, %v335
        %v356 = vsel %vm156, 0.0, %v337
        %v357 = vsel %vm156, 0.0, %v339
        %v358 = vsel %vm156, 0.0, %v341
        %v359 = vsel %vm156, 0.0, %v343
        %360 = vrot.lane.b32.xlu0 %v231, 16
        %v361 = vpop.permute.xlu0 %360
        %v362 = vsel %vm239, %v361, %v231
        %363 = vrot.lane.b32.xlu0 %v232, 16
        %v364 = vpop.permute.xlu0 %363
        %v365 = vsel %vm239, %v364, %v232
        %366 = vrot.lane.b32.xlu0 %v233, 16
        %v367 = vpop.permute.xlu0 %366
        %v368 = vsel %vm239, %v367, %v233
        %369 = vrot.lane.b32.xlu0 %v234, 16
        %v370 = vpop.permute.xlu0 %369
        %v371 = vsel %vm239, %v370, %v234
        %372 = vrot.lane.b32.xlu0 %v235, 16
        %v373 = vpop.permute.xlu0 %372
        %v374 = vsel %vm239, %v373, %v235
        %375 = vrot.lane.b32.xlu0 %v236, 16
        %v376 = vpop.permute.xlu0 %375
        %v377 = vsel %vm239, %v376, %v236
        %378 = vrot.lane.b32.xlu0 %v237, 16
        %v379 = vpop.permute.xlu0 %378
        %v380 = vsel %vm239, %v379, %v237
        %381 = vrot.lane.b32.xlu0 %v238, 16
        %v382 = vpop.permute.xlu0 %381
        %v383 = vsel %vm239, %v382, %v238
        %384 = vrot.lane.b32.xlu0 %v362, 16
        %v385 = vpop.permute.xlu0 %384
        %386 = vrot.lane.b32.xlu0 %v365, 16
        %v387 = vpop.permute.xlu0 %386
        %388 = vrot.lane.b32.xlu0 %v368, 16
        %v389 = vpop.permute.xlu0 %388
        %390 = vrot.lane.b32.xlu0 %v371, 16
        %v391 = vpop.permute.xlu0 %390
        %392 = vrot.lane.b32.xlu0 %v374, 16
        %v393 = vpop.permute.xlu0 %392
        %394 = vrot.lane.b32.xlu0 %v377, 16
        %v395 = vpop.permute.xlu0 %394
        %396 = vrot.lane.b32.xlu0 %v380, 16
        %v397 = vpop.permute.xlu0 %396
        %398 = vrot.lane.b32.xlu0 %v383, 16
        %v399 = vpop.permute.xlu0 %398
        %v400 = vsel %vm239, %v385, %v231
        %v401 = vsel %vm239, %v387, %v232
        %v402 = vsel %vm239, %v389, %v233
        %v403 = vsel %vm239, %v391, %v234
        %v404 = vsel %vm239, %v393, %v235
        %v405 = vsel %vm239, %v395, %v236
        %v406 = vsel %vm239, %v397, %v237
        %v407 = vsel %vm239, %v399, %v238
        %416 = vrot.lane.b32.xlu0 %v400, 113
        %v417 = vpop.permute.xlu0 %416
        %418 = vrot.lane.b32.xlu0 %v401, 113
        %v419 = vpop.permute.xlu0 %418
        %420 = vrot.lane.b32.xlu0 %v402, 113
        %v421 = vpop.permute.xlu0 %420
        %422 = vrot.lane.b32.xlu0 %v403, 113
        %v423 = vpop.permute.xlu0 %422
        %424 = vrot.lane.b32.xlu0 %v404, 113
        %v425 = vpop.permute.xlu0 %424
        %426 = vrot.lane.b32.xlu0 %v405, 113
        %v427 = vpop.permute.xlu0 %426
        %428 = vrot.lane.b32.xlu0 %v406, 113
        %v429 = vpop.permute.xlu0 %428
        %430 = vrot.lane.b32.xlu0 %v407, 113
        %v431 = vpop.permute.xlu0 %430
        %v440 = vsel %vm155, 0.0, %v417
        %v441 = vsel %vm155, 0.0, %v419
        %v442 = vsel %vm155, 0.0, %v421
        %v443 = vsel %vm155, 0.0, %v423
        %v444 = vsel %vm155, 0.0, %v425
        %v445 = vsel %vm155, 0.0, %v427
        %v446 = vsel %vm155, 0.0, %v429
        %v447 = vsel %vm155, 0.0, %v431
        %448 = vrot.lane.b32.xlu0 %v400, 127
        %v449 = vpop.permute.xlu0 %448
        %450 = vrot.lane.b32.xlu0 %v401, 127
        %v451 = vpop.permute.xlu0 %450
        %452 = vrot.lane.b32.xlu0 %v402, 127
        %v453 = vpop.permute.xlu0 %452
        %454 = vrot.lane.b32.xlu0 %v403, 127
        %v455 = vpop.permute.xlu0 %454
        %456 = vrot.lane.b32.xlu0 %v404, 127
        %v457 = vpop.permute.xlu0 %456
        %458 = vrot.lane.b32.xlu0 %v405, 127
        %v459 = vpop.permute.xlu0 %458
        %460 = vrot.lane.b32.xlu0 %v406, 127
        %v461 = vpop.permute.xlu0 %460
        %462 = vrot.lane.b32.xlu0 %v407, 127
        %v463 = vpop.permute.xlu0 %462
        %v472 = vsel %vm156, 0.0, %v449
        %v473 = vsel %vm156, 0.0, %v451
        %v474 = vsel %vm156, 0.0, %v453
        %v475 = vsel %vm156, 0.0, %v455
        %v476 = vsel %vm156, 0.0, %v457
        %v477 = vsel %vm156, 0.0, %v459
        %v478 = vsel %vm156, 0.0, %v461
        %v479 = vsel %vm156, 0.0, %v463
        %v480 = vsub.f32 %v352, %v320
        %v481 = vsub.f32 %v353, %v321
        %v482 = vsub.f32 %v354, %v322
        %v483 = vsub.f32 %v355, %v323
        %v484 = vsub.f32 %v356, %v324
        %v485 = vsub.f32 %v357, %v325
        %v486 = vsub.f32 %v358, %v326
        %v487 = vsub.f32 %v359, %v327
        %v488 = vmul.f32 %v231, 2.0
        %v489 = vmul.f32 %v232, 2.0
        %v490 = vmul.f32 %v233, 2.0
        %v491 = vmul.f32 %v234, 2.0
        %v492 = vmul.f32 %v235, 2.0
        %v493 = vmul.f32 %v236, 2.0
        %v494 = vmul.f32 %v237, 2.0
        %v495 = vmul.f32 %v238, 2.0
        %v496 = vadd.f32 %v440, %v488
        %v497 = vadd.f32 %v441, %v489
        %v498 = vadd.f32 %v442, %v490
        %v499 = vadd.f32 %v443, %v491
        %v500 = vadd.f32 %v444, %v492
        %v501 = vadd.f32 %v445, %v493
        %v502 = vadd.f32 %v446, %v494
        %v503 = vadd.f32 %v447, %v495
        %v504 = vadd.f32 %v496, %v472
        %v505 = vadd.f32 %v497, %v473
        %v506 = vadd.f32 %v498, %v474
        %v507 = vadd.f32 %v499, %v475
        %v508 = vadd.f32 %v500, %v476
        %v509 = vadd.f32 %v501, %v477
        %v510 = vadd.f32 %v502, %v478
        %v511 = vadd.f32 %v503, %v479
        %v512 = vmul.f32 %v480, %v480
        %v513 = vmul.f32 %v481, %v481
        %v514 = vmul.f32 %v482, %v482
        %v515 = vmul.f32 %v483, %v483
        %v516 = vmul.f32 %v484, %v484
        %v517 = vmul.f32 %v485, %v485
        %v518 = vmul.f32 %v486, %v486
        %v519 = vmul.f32 %v487, %v487
        %v520 = vmul.f32 %v504, %v504
        %v521 = vmul.f32 %v505, %v505
        %v522 = vmul.f32 %v506, %v506
        %v523 = vmul.f32 %v507, %v507
        %v524 = vmul.f32 %v508, %v508
        %v525 = vmul.f32 %v509, %v509
        %v526 = vmul.f32 %v510, %v510
        %v527 = vmul.f32 %v511, %v511
        %v528 = vadd.f32 %v512, %v520
        %v529 = vadd.f32 %v513, %v521
        %v530 = vadd.f32 %v514, %v522
        %v531 = vadd.f32 %v515, %v523
        %v532 = vadd.f32 %v516, %v524
        %v533 = vadd.f32 %v517, %v525
        %v534 = vadd.f32 %v518, %v526
        %v535 = vadd.f32 %v519, %v527
        %v536 = vrsqrt.pop %v528
        %v537 = vmul.f32 %v528, %v536
        %vm538 = vcmp.eq.f32.partialorder %v528, inf
        %v539 = vsel %vm538, %v528, %v537
        %vm540 = vcmp.eq.f32.partialorder %v528, 0.0
        %v541 = vand.u32 %v528, 2147483648
        %v542 = vsel %vm540, %v541, %v539
        %v543 = vrsqrt.pop %v529
        %v544 = vmul.f32 %v529, %v543
        %vm545 = vcmp.eq.f32.partialorder %v529, inf
        %v546 = vsel %vm545, %v529, %v544
        %vm547 = vcmp.eq.f32.partialorder %v529, 0.0
        %v548 = vand.u32 %v529, 2147483648
        %v549 = vsel %vm547, %v548, %v546
        %v550 = vrsqrt.pop %v530
        %v551 = vmul.f32 %v530, %v550
        %vm552 = vcmp.eq.f32.partialorder %v530, inf
        %v553 = vsel %vm552, %v530, %v551
        %vm554 = vcmp.eq.f32.partialorder %v530, 0.0
        %v555 = vand.u32 %v530, 2147483648
        %v556 = vsel %vm554, %v555, %v553
        %v557 = vrsqrt.pop %v531
        %v558 = vmul.f32 %v531, %v557
        %vm559 = vcmp.eq.f32.partialorder %v531, inf
        %v560 = vsel %vm559, %v531, %v558
        %vm561 = vcmp.eq.f32.partialorder %v531, 0.0
        %v562 = vand.u32 %v531, 2147483648
        %v563 = vsel %vm561, %v562, %v560
        %v564 = vrsqrt.pop %v532
        %v565 = vmul.f32 %v532, %v564
        %vm566 = vcmp.eq.f32.partialorder %v532, inf
        %v567 = vsel %vm566, %v532, %v565
        %vm568 = vcmp.eq.f32.partialorder %v532, 0.0
        %v569 = vand.u32 %v532, 2147483648
        %v570 = vsel %vm568, %v569, %v567
        %v571 = vrsqrt.pop %v533
        %v572 = vmul.f32 %v533, %v571
        %vm573 = vcmp.eq.f32.partialorder %v533, inf
        %v574 = vsel %vm573, %v533, %v572
        %vm575 = vcmp.eq.f32.partialorder %v533, 0.0
        %v576 = vand.u32 %v533, 2147483648
        %v577 = vsel %vm575, %v576, %v574
        %v578 = vrsqrt.pop %v534
        %v579 = vmul.f32 %v534, %v578
        %vm580 = vcmp.eq.f32.partialorder %v534, inf
        %v581 = vsel %vm580, %v534, %v579
        %vm582 = vcmp.eq.f32.partialorder %v534, 0.0
        %v583 = vand.u32 %v534, 2147483648
        %v584 = vsel %vm582, %v583, %v581
        %v585 = vrsqrt.pop %v535
        %v586 = vmul.f32 %v535, %v585
        %vm587 = vcmp.eq.f32.partialorder %v535, inf
        %v588 = vsel %vm587, %v535, %v586
        %vm589 = vcmp.eq.f32.partialorder %v535, 0.0
        %v590 = vand.u32 %v535, 2147483648
        %v591 = vsel %vm589, %v590, %v588
        %v592 = vmin.f32 %v542, 3.0
        %v593 = vmin.f32 %v549, 3.0
        %v594 = vmin.f32 %v556, 3.0
        %v595 = vmin.f32 %v563, 3.0
        %v596 = vmin.f32 %v570, 3.0
        %v597 = vmin.f32 %v577, 3.0
        %v598 = vmin.f32 %v584, 3.0
        %v599 = vmin.f32 %v591, 3.0
        %vm600 = vcmask 130048
        %601 = vst.msk [vmem:[%s135] sm:$0xff] %vm600, %v592
        %602 = vst.msk [vmem:[%s135 + $0x8] sm:$0xff] %vm600, %v593
        %603 = vst.msk [vmem:[%s135 + $0x10] sm:$0xff] %vm600, %v594
        %604 = vst.msk [vmem:[%s135 + $0x18] sm:$0xff] %vm600, %v595
        %605 = vst.msk [vmem:[%s135 + $0x20] sm:$0xff] %vm600, %v596
        %606 = vst.msk [vmem:[%s135 + $0x28] sm:$0xff] %vm600, %v597
        %607 = vst.msk [vmem:[%s135 + $0x30] sm:$0xff] %vm600, %v598
        %608 = vst.msk [vmem:[%s135 + $0x38] sm:$0xff] %vm600, %v599
        %s609 = sand.u32 %s52, 1
        %s610 = scalar_lea.sflag [#allocation4], %s609
        %s611 = sand.u32 %s52, 1
        %s612 = smul.addr %s611, 64
        %s613 = scalar_lea.vmem [#allocation5], %s612
        // Predicated region
        $region29: #{tpu_custom_call.1} parent=23 // pred_check
          %p614 = pneg %p62
        $region30: #{tpu_custom_call.1} parent=23 // pred_check_branch
          %616 = sbr.rel (%p614) target = $region32
        $region31: #{tpu_custom_call.1} parent=23 // pred_region
          %s617 = smul.u32 4, %s18
          %s619 = ssub.s32 1024, 1024
          %620 = vsyncadd %s610, %s619
          %s621 = smul.addr %s617, 2
          %s622 = smul.addr %s621, 128
          %s623 = scalar_lea.hbm %s1, %s622
          %s624 = sshll.u32 %s613, 4
          %s625 = int_to_ptr.vmem [resolvable:$true] %s624
          %630 = dma.vmem_to_hbm [thread:$0]  %s625, 1024, %s623, %s610, 128, 128, 8
        $region32: #{tpu_custom_call.1} parent=23 // pred_fallthru
          _
      $region24: #{tpu_custom_call.1} parent=5 // pred_fallthru
        _
      %p631 = scmp.le.s32.totalorder 2, %s13
      // Predicated region
      $region33: #{tpu_custom_call.1} parent=5 // pred_check
        %p632 = pneg %p631
      $region34: #{tpu_custom_call.1} parent=5 // pred_check_branch
        %634 = sbr.rel (%p632) target = $region36
      $region35: #{tpu_custom_call.1} parent=5 // pred_region
        %s635 = ssub.s32 %s13, 2
        // Predicated region
        $region37: #{tpu_custom_call.1} parent=35 // pred_check
          %p636 = pneg %p68
        $region38: #{tpu_custom_call.1} parent=35 // pred_check_branch
          %638 = sbr.rel (%p636) target = $region40
        $region39: #{tpu_custom_call.1} parent=35 // pred_region
          %s639 = sand.u32 %s53, 1
          %s640 = scalar_lea.sflag [#allocation4], %s639
          %s641 = sand.u32 %s53, 1
          %s642 = smul.addr %s641, 64
          %s643 = scalar_lea.vmem [#allocation5], %s642
          %644 = dma.done %s640, 1024
        $region40: #{tpu_custom_call.1} parent=35 // pred_fallthru
          _
      $region36: #{tpu_custom_call.1} parent=5 // pred_fallthru
        _
    $region6: #{tpu_custom_call.1} parent=1 // loop_footer
      %s17 = sadd.s32 1, %s13
    $region7: #{tpu_custom_call.1} parent=1 // loop_footer_branch
      %12 = sbr.rel target = $region3
    $region8: #{tpu_custom_call.1} parent=1 // loop_exit
      _
    %645 = vsyncpa [#allocation3], 1
    %s646 = scalar_lea.sflag [#allocation3], 1
    %647 = vsyncpa %s646, 1
    %648 = vsyncpa [#allocation4], 1
    %s649 = scalar_lea.sflag [#allocation4], 1
    %650 = vsyncpa %s649, 1

</llo_original>
